<compile_context>
chip_gen: v5e
topology: v5e:2x2
jax: 0.10.0
libtpu: 0.0.40
codegen_flags: <defaults>
</compile_context>

<pallas_src>
import functools

import jax
import jax.numpy as jnp
from jax.experimental import pallas as pl
from jax.experimental.pallas import tpu as pltpu

LANES = 128


def _categorical_logprob_kernel(idx_ref, logp_ref, o_ref, *, num_categories):
    """Per-tile gather of log-probabilities via a K-way select chain.

    idx_ref : (tile_rows, 128) int8/int32 VMEM -- category ids, lane-dense
    logp_ref: (K,)             f32 SMEM        -- normalized log-probabilities
    o_ref   : (tile_rows, 128) f32 VMEM        -- gathered log-probs
    """
    # Widen to 32-bit once per vreg (VPU unpack, negligible vs HBM); compares then produce
    # masks in 32-bit lane layout matching the f32 selects. Truncation already happened in
    # the wrapper cast (matches torch .long()).
    idx = idx_ref[...].astype(jnp.int32)                   # (tile_rows, 128)

    # Hoist all K SMEM scalar reads above the select chain (clean scalar path).
    logp = [logp_ref[k] for k in range(num_categories)]

    # Out-of-range / negative ids -> -inf (log-prob of an impossible event).
    acc = jnp.full(idx.shape, -jnp.inf, jnp.float32)
    for k in range(num_categories):                        # K is small & static: unrolled VPU selects
        acc = jnp.where(idx == k, logp[k], acc)

    o_ref[...] = acc


def categorical_node_forward(x, p, scope, *, tile_rows=2048):
    """JAX wrapper mirroring CategoricalNode(num_categories, p, scope).forward(x)."""
    n = x.shape[0]
    k = int(p.shape[0])

    # Narrow HBM carrier for the index column: int8 is exact for K <= 127, else fall back
    # to int32 (int16 avoided for lowering robustness).
    idx_dtype = jnp.int8 if k <= 127 else jnp.int32
    sub = 32 if idx_dtype == jnp.int8 else 8               # packed sublane multiple

    # Normalized log-probs computed once outside the grid (K elements).
    p32 = p.astype(jnp.float32)
    log_p = jnp.log(p32) - jnp.log(jnp.sum(p32))           # (K,)

    # Fold the batch onto the lane axis -> lane-dense (rows, 128) input and output.
    rows = pl.cdiv(n, LANES)
    # Target >= 2 grid steps (so v7x can shard across its 2 TCs) while capping the block at
    # tile_rows; round to the packed-sublane multiple of the carrier dtype.
    block_rows = min(tile_rows, max(sub, pl.cdiv(rows, 2)))
    block_rows = max(sub, (block_rows // sub) * sub)
    rows_pad = pl.cdiv(rows, block_rows) * block_rows
    n_pad = rows_pad * LANES

    # Single fused slice + truncating cast + pad + reshape in the narrow dtype.
    idx2d = jnp.pad(x[:, scope].astype(idx_dtype), (0, n_pad - n)).reshape(rows_pad, LANES)

    grid = (rows_pad // block_rows,)
    out = pl.pallas_call(
        functools.partial(_categorical_logprob_kernel, num_categories=k),
        out_shape=jax.ShapeDtypeStruct((rows_pad, LANES), jnp.float32),
        grid=grid,
        in_specs=[
            pl.BlockSpec((block_rows, LANES), lambda i: (i, 0)),
            pl.BlockSpec(memory_space=pltpu.MemorySpace.SMEM),
        ],
        out_specs=pl.BlockSpec((block_rows, LANES), lambda i: (i, 0)),
        compiler_params=pltpu.CompilerParams(
            dimension_semantics=("parallel",),
        ),
    )(idx2d, log_p)

    return out.reshape(n_pad)[:n]                          # (N,)


if __name__ == "__main__":
    key = jax.random.PRNGKey(0)
    k_p, k_x, k_idx, k_x2, k_idx2, k_p3, k_idx3 = jax.random.split(key, 7)

    num_categories = 4
    scope = 2
    features = 4

    # Deterministic parameter init, mimicking np.random.uniform then normalize.
    p_raw = jax.random.uniform(k_p, (num_categories,), minval=0.0, maxval=1.0)
    p = p_raw / jnp.sum(p_raw)
    log_p_ref = jnp.log(p / jnp.sum(p))

    # --- Small case (batch=8): single block, int8 carrier ---
    batch = 8
    x = jax.random.uniform(k_x, (batch, features), minval=0.0, maxval=1.0)
    idx = jax.random.randint(k_idx, (batch,), 0, num_categories).astype(jnp.float32)
    x = x.at[:, scope].set(idx)

    out = jax.block_until_ready(categorical_node_forward(x, p, scope))
    ref = log_p_ref[idx.astype(jnp.int32)]
    assert out.shape == (batch,)
    assert jnp.allclose(out, ref, atol=1e-5, rtol=1e-5)

    # --- Larger case (batch=10000, small tile) to exercise multi-step grid + padding ---
    batch2 = 10000
    x2 = jax.random.uniform(k_x2, (batch2, features), minval=0.0, maxval=1.0)
    idx2 = jax.random.randint(k_idx2, (batch2,), 0, num_categories).astype(jnp.float32)
    x2 = x2.at[:, scope].set(idx2)

    out2 = jax.block_until_ready(categorical_node_forward(x2, p, scope, tile_rows=32))
    ref2 = log_p_ref[idx2.astype(jnp.int32)]
    assert out2.shape == (batch2,)
    assert jnp.allclose(out2, ref2, atol=1e-5, rtol=1e-5)

    # --- K > 127 path (int32 carrier fallback) ---
    num_categories3 = 130
    batch3 = 2000
    p3_raw = jax.random.uniform(k_p3, (num_categories3,), minval=0.0, maxval=1.0)
    p3 = p3_raw / jnp.sum(p3_raw)
    log_p3_ref = jnp.log(p3 / jnp.sum(p3))
    x3 = jnp.zeros((batch3, features), jnp.float32)
    idx3 = jax.random.randint(k_idx3, (batch3,), 0, num_categories3).astype(jnp.float32)
    x3 = x3.at[:, scope].set(idx3)

    out3 = jax.block_until_ready(categorical_node_forward(x3, p3, scope))
    ref3 = log_p3_ref[idx3.astype(jnp.int32)]
    assert out3.shape == (batch3,)
    assert jnp.allclose(out3, ref3, atol=1e-5, rtol=1e-5)

    print("KERNEL_OK")
</pallas_src>

<mosaic_0001>
module attributes {stable_mosaic.version = 11 : i64} {
  func.func @_categorical_logprob_kernel(%arg0: i32, %arg1: memref<32x128xi8, #tpu.memory_space<vmem>>, %arg2: memref<4xf32, #tpu.memory_space<smem>>, %arg3: memref<32x128xf32, #tpu.memory_space<vmem>>) attributes {dimension_semantics = [#tpu.dimension_semantics<parallel>], iteration_bounds = array<i64: 1>, scalar_prefetch = 0 : i64, scratch_operands = 0 : i64, tpu.core_type = #tpu.core_type<tc>, window_params = [{transform_indices = @transform_0, window_bounds = array<i64: 32, 128>}, {transform_indices = @transform_1, window_bounds = array<i64: 4>}, {transform_indices = @transform_2, window_bounds = array<i64: 32, 128>}]} {
    %c0 = arith.constant 0 : index
    %c0_0 = arith.constant 0 : index
    %0 = vector.load %arg1[%c0, %c0_0] : memref<32x128xi8, #tpu.memory_space<vmem>>, vector<32x128xi8>
    %1 = arith.extsi %0 : vector<32x128xi8> to vector<32x128xi32>
    %c0_1 = arith.constant 0 : index
    %2 = memref.load %arg2[%c0_1] : memref<4xf32, #tpu.memory_space<smem>>
    %c1 = arith.constant 1 : index
    %3 = memref.load %arg2[%c1] : memref<4xf32, #tpu.memory_space<smem>>
    %c2 = arith.constant 2 : index
    %4 = memref.load %arg2[%c2] : memref<4xf32, #tpu.memory_space<smem>>
    %c3 = arith.constant 3 : index
    %5 = memref.load %arg2[%c3] : memref<4xf32, #tpu.memory_space<smem>>
    %cst = arith.constant 0xFF800000 : f32
    %6 = vector.broadcast %cst : f32 to vector<32x128xf32>
    %c0_i32 = arith.constant 0 : i32
    %7 = vector.broadcast %c0_i32 : i32 to vector<32x128xi32>
    %8 = arith.cmpi eq, %1, %7 : vector<32x128xi32>
    %9 = vector.broadcast %2 : f32 to vector<32x128xf32>
    %10 = arith.select %8, %9, %6 : vector<32x128xi1>, vector<32x128xf32>
    %c1_i32 = arith.constant 1 : i32
    %11 = vector.broadcast %c1_i32 : i32 to vector<32x128xi32>
    %12 = arith.cmpi eq, %1, %11 : vector<32x128xi32>
    %13 = vector.broadcast %3 : f32 to vector<32x128xf32>
    %14 = arith.select %12, %13, %10 : vector<32x128xi1>, vector<32x128xf32>
    %c2_i32 = arith.constant 2 : i32
    %15 = vector.broadcast %c2_i32 : i32 to vector<32x128xi32>
    %16 = arith.cmpi eq, %1, %15 : vector<32x128xi32>
    %17 = vector.broadcast %4 : f32 to vector<32x128xf32>
    %18 = arith.select %16, %17, %14 : vector<32x128xi1>, vector<32x128xf32>
    %c3_i32 = arith.constant 3 : i32
    %19 = vector.broadcast %c3_i32 : i32 to vector<32x128xi32>
    %20 = arith.cmpi eq, %1, %19 : vector<32x128xi32>
    %21 = vector.broadcast %5 : f32 to vector<32x128xf32>
    %22 = arith.select %20, %21, %18 : vector<32x128xi1>, vector<32x128xf32>
    %c0_2 = arith.constant 0 : index
    %c0_3 = arith.constant 0 : index
    %23 = vector.load %arg3[%c0_2, %c0_3] : memref<32x128xf32, #tpu.memory_space<vmem>>, vector<32x128xf32>
    tpu.vector_store %arg3[%c0_2, %c0_3], %22 {strides = array<i32>} : memref<32x128xf32, #tpu.memory_space<vmem>>, vector<32x128xf32>,
    return
  }
  func.func @transform_0(%arg0: i32) -> (i32, i32) {
    %c0_i32 = arith.constant 0 : i32
    %c0_i32_0 = arith.constant 0 : i32
    return %arg0, %c0_i32 : i32, i32
  }
  func.func @transform_1(%arg0: i32) -> i32 {
    %c0_i32 = arith.constant 0 : i32
    %c0_i32_0 = arith.constant 0 : i32
    return %c0_i32 : i32
  }
  func.func @transform_2(%arg0: i32) -> (i32, i32) {
    %c0_i32 = arith.constant 0 : i32
    %c0_i32_0 = arith.constant 0 : i32
    return %arg0, %c0_i32 : i32, i32
  }
}

</mosaic_0001>

<llo_original>
// kernel: tpu_custom_call.1
$region0: #{tpu_custom_call.1}
  #allocation0 [shape = 'u32[]', space=smem, size = 0x4, offset = 0x4, fixed_abs, tag = 'smem constant byte address 0x4 - core index']
  #allocation1 [shape = 'u32[72,128]{1,0:T(1,128)}', space=vmem, size = 0x9000, scoped, tag = 'internal scratch']
  %s0 = inlined_call_operand.hbm [shape: s8[32,128], index: 0, kind: input, shape index: {}]
  %s1 = inlined_call_operand.hbm [shape: f32[4], index: 1, kind: input, shape index: {}]
  %s2 = inlined_call_operand.hbm [shape: f32[32,128], index: 2, kind: output, shape index: {}]
  %s3 = sld [smem:[#allocation0]]
  $region26: #{tpu_custom_call.1} parent=0
    _
  %s5 = ssub.s32 1, %s3
  %s6 = scalar_select 0, %s5, %s3
  $region1: #{tpu_custom_call.1} parent=0
    #allocation2 [shape = 'u8[4096]{0}', space=vmem, size = 0x1000, scoped, tag = 'input window, operand 0, single buffered']
    #allocation3 [shape = 's32[1]{0}', space=sflag, size = 0x4, scoped, tag = 'scoped memory for tpu_custom_call.1']
    #allocation4 [shape = 's32[1]{0}', space=sflag, size = 0x4, scoped, tag = 'scoped memory for tpu_custom_call.1']
    #allocation5 [shape = 's32[1]{0}', space=sflag, size = 0x4, scoped, tag = 'scoped memory for tpu_custom_call.1']
    #allocation6 [shape = 'u8[512]{0}', space=smem, size = 0x200, scoped, tag = 'input window, operand 1, single buffered']
    #allocation7 [shape = 'u8[16384]{0}', space=vmem, size = 0x4000, scoped, tag = 'output window, operand 0, single buffered']
    %7 = vsyncpa [#allocation3], 0
    %8 = vsyncpa [#allocation5], 0
    %9 = vsyncpa [#allocation4], 0
    // Predicated region
    $region2: #{tpu_custom_call.1} parent=1 // pred_check
      _
    $region3: #{tpu_custom_call.1} parent=1 // pred_check_branch
      %11 = sbr.rel (0) target = $region5
    $region4: #{tpu_custom_call.1} parent=1 // pred_region
      %13 = vsyncadd [#allocation3], 0
      %s15 = sshll.u32 %s0, 4
      %s16 = int_to_ptr.hbm [resolvable:$true] %s15
      %s17 = sshll.u32 [#allocation2], 4
      %s18 = int_to_ptr.vmem [resolvable:$true] %s17
      %20 = dma.hbm_to_vmem [thread:$0]  %s16, 128, %s18, [#allocation3]
    $region5: #{tpu_custom_call.1} parent=1 // pred_fallthru
      _
    // Predicated region
    $region6: #{tpu_custom_call.1} parent=1 // pred_check
      _
    $region7: #{tpu_custom_call.1} parent=1 // pred_check_branch
      %22 = sbr.rel (0) target = $region9
    $region8: #{tpu_custom_call.1} parent=1 // pred_region
      %24 = vsyncadd [#allocation5], 0
      %s26 = sshll.u32 %s1, 4
      %s27 = int_to_ptr.hbm [resolvable:$true] %s26
      %29 = dma.hbm_to_smem %s27, 16, [#allocation6], [#allocation5]
    $region9: #{tpu_custom_call.1} parent=1 // pred_fallthru
      _
    // Predicated region
    $region10: #{tpu_custom_call.1} parent=1 // pred_check
      _
    $region11: #{tpu_custom_call.1} parent=1 // pred_check_branch
      %31 = sbr.rel (0) target = $region13
    $region12: #{tpu_custom_call.1} parent=1 // pred_region
      %33 = dma.done [#allocation3], 128
    $region13: #{tpu_custom_call.1} parent=1 // pred_fallthru
      _
    // Predicated region
    $region14: #{tpu_custom_call.1} parent=1 // pred_check
      _
    $region15: #{tpu_custom_call.1} parent=1 // pred_check_branch
      %35 = sbr.rel (0) target = $region17
    $region16: #{tpu_custom_call.1} parent=1 // pred_region
      %37 = dma.done [#allocation5], 16
    $region17: #{tpu_custom_call.1} parent=1 // pred_fallthru
      _
    %38 = sfence
    %v39 = vld [vmem:[#allocation2] sm:$0xff]
    %v40 = vunpack.c.0.s8 %v39
    %v41 = vunpack.c.1.s8 %v39
    %v42 = vunpack.c.2.s8 %v39
    %v43 = vunpack.c.3.s8 %v39
    %s44 = sld [smem:[#allocation6]]
    %s45 = sld [smem:[#allocation6 + $0x1]]
    %s46 = sld [smem:[#allocation6 + $0x2]]
    %s47 = sld [smem:[#allocation6 + $0x3]]
    %vm48 = vcmp.eq.s32.totalorder %v40, 0
    %vm49 = vcmp.eq.s32.totalorder %v41, 0
    %vm50 = vcmp.eq.s32.totalorder %v42, 0
    %vm51 = vcmp.eq.s32.totalorder %v43, 0
    %v52 = vstv %s44
    %v53 = vsel %vm48, %v52, -inf
    %v54 = vsel %vm49, %v52, -inf
    %v55 = vsel %vm50, %v52, -inf
    %v56 = vsel %vm51, %v52, -inf
    %vm57 = vcmp.eq.s32.totalorder %v40, 1
    %vm58 = vcmp.eq.s32.totalorder %v41, 1
    %vm59 = vcmp.eq.s32.totalorder %v42, 1
    %vm60 = vcmp.eq.s32.totalorder %v43, 1
    %v61 = vstv %s45
    %v62 = vsel %vm57, %v61, %v53
    %v63 = vsel %vm58, %v61, %v54
    %v64 = vsel %vm59, %v61, %v55
    %v65 = vsel %vm60, %v61, %v56
    %vm66 = vcmp.eq.s32.totalorder %v40, 2
    %vm67 = vcmp.eq.s32.totalorder %v41, 2
    %vm68 = vcmp.eq.s32.totalorder %v42, 2
    %vm69 = vcmp.eq.s32.totalorder %v43, 2
    %v70 = vstv %s46
    %v71 = vsel %vm66, %v70, %v62
    %v72 = vsel %vm67, %v70, %v63
    %v73 = vsel %vm68, %v70, %v64
    %v74 = vsel %vm69, %v70, %v65
    %vm75 = vcmp.eq.s32.totalorder %v40, 3
    %vm76 = vcmp.eq.s32.totalorder %v41, 3
    %vm77 = vcmp.eq.s32.totalorder %v42, 3
    %vm78 = vcmp.eq.s32.totalorder %v43, 3
    %v79 = vstv %s47
    %v80 = vsel %vm75, %v79, %v71
    %v81 = vsel %vm76, %v79, %v72
    %v82 = vsel %vm77, %v79, %v73
    %v83 = vsel %vm78, %v79, %v74
    %84 = vst [vmem:[#allocation7] sm:$0xff] %v80
    %85 = vst [vmem:[#allocation7 + $0x8] sm:$0xff] %v81
    %86 = vst [vmem:[#allocation7 + $0x10] sm:$0xff] %v82
    %87 = vst [vmem:[#allocation7 + $0x18] sm:$0xff] %v83
    // Predicated region
    $region18: #{tpu_custom_call.1} parent=1 // pred_check
      _
    $region19: #{tpu_custom_call.1} parent=1 // pred_check_branch
      %89 = sbr.rel (0) target = $region21
    $region20: #{tpu_custom_call.1} parent=1 // pred_region
      %91 = vsyncadd [#allocation4], 0
      %s92 = sshll.u32 [#allocation7], 4
      %s93 = int_to_ptr.vmem [resolvable:$true] %s92
      %s94 = sshll.u32 %s2, 4
      %s95 = int_to_ptr.hbm [resolvable:$true] %s94
      %100 = dma.vmem_to_hbm [thread:$0]  %s93, 512, %s95, [#allocation4], 128, 128, 8
    $region21: #{tpu_custom_call.1} parent=1 // pred_fallthru
      _
    // Predicated region
    $region22: #{tpu_custom_call.1} parent=1 // pred_check
      _
    $region23: #{tpu_custom_call.1} parent=1 // pred_check_branch
      %102 = sbr.rel (0) target = $region25
    $region24: #{tpu_custom_call.1} parent=1 // pred_region
      %104 = dma.done [#allocation4], 512
    $region25: #{tpu_custom_call.1} parent=1 // pred_fallthru
      _
    %105 = vsyncpa [#allocation3], 1
    %106 = vsyncpa [#allocation4], 1
    %107 = vsyncpa [#allocation5], 1

</llo_original>
